<compile_context>
chip_gen: v5e
topology: v5e:2x2
jax: 0.10.0
libtpu: 0.0.40
codegen_flags: <defaults>
</compile_context>

<pallas_src>
import functools

import jax
import jax.numpy as jnp
from jax.experimental import pallas as pl
from jax.experimental.pallas import tpu as pltpu


def _round_up(x, n):
    return ((x + n - 1) // n) * n


def _fc_network_kernel(*refs, num_hidden):
    """Fused MLP forward on one (TB, d_pad) batch tile.

    refs = (x_ref, w_hidden_refs[0..num_hidden-1], w_last_ref, o_ref)
      x_ref       : (TB, d_pad)      f32 activations, features on the lane axis
      w_hidden[l] : (in_pad, m_pad)  f32, (in, out) layout, relu layers, scales pre-folded
      w_last_ref  : (1, m_pad)       f32 row of the final Linear(m -> 1), scale pre-folded
      o_ref       : (TB, 128)        lane-dense output block; column 0 is the result
    """
    x_ref = refs[0]
    w_hidden = refs[1:1 + num_hidden]
    w_last_ref = refs[1 + num_hidden]
    o_ref = refs[2 + num_hidden]

    h = x_ref[...]
    # Hidden layers: MXU matmul (f32 accumulate) + VPU relu. The MF scales are folded into
    # the weights at prep time (exact: relu(c*z) = c*relu(z) for c > 0).
    for w_ref in w_hidden:
        h = jnp.dot(h, w_ref[...], preferred_element_type=jnp.float32)
        h = jnp.maximum(h, 0.0)

    # Final Linear(m -> 1): VPU multiply + lane reduction instead of an N=1 MXU matmul.
    out = jnp.sum(h * w_last_ref[...], axis=-1, keepdims=True)          # (TB, 1)

    # Lane-dense store (unmasked vst); the wrapper slices column 0 back out.
    o_ref[...] = jnp.broadcast_to(out, o_ref.shape).astype(o_ref.dtype)


def prepare_fc_params(weights, *, m):
    """One-time weight prep -- call OUTSIDE the per-step hot path.

    `weights` is the list of PyTorch Linear weights, layout (out_features, in_features):
        [(m, d)] + [(m, m)] * (L - 2) + [(1, m)]
    Returns a params dict with hidden weights transposed to (in, out), zero-padded to lane
    multiples of 128, and the MF scales [1.0] + [1/m]*(L-1) folded in (exact, scales > 0).
    """
    L = len(weights)
    assert L >= 2
    inv_m = 1.0 / float(m)
    d = weights[0].shape[1]
    d_pad = _round_up(d, 128)
    m_pad = _round_up(m, 128)

    scales = [1.0] + [inv_m] * (L - 1)
    in_pads = [d_pad] + [m_pad] * (L - 2)

    # For very large m, cast these to bfloat16 here (MXU-native input type; halves HBM/VMEM
    # traffic of the dominant W1 tile) while keeping f32 accumulation in the kernel.
    hidden = []
    for l in range(L - 1):
        w_t = (jnp.asarray(weights[l], jnp.float32) * scales[l]).T       # (in, out)
        w_t = jnp.pad(w_t, ((0, in_pads[l] - w_t.shape[0]),
                            (0, m_pad - w_t.shape[1])))
        hidden.append(w_t)

    w_last = jnp.asarray(weights[L - 1], jnp.float32) * scales[L - 1]    # (1, m)
    w_last = jnp.pad(w_last, ((0, 0), (0, m_pad - w_last.shape[1])))     # (1, m_pad)

    return dict(hidden=tuple(hidden), w_last=w_last, d=d, d_pad=d_pad, m_pad=m_pad)


def _estimate_vmem_bytes(tb, d_pad, m_pad, num_hidden, itemsize=4):
    w_bytes = (d_pad * m_pad + (num_hidden - 1) * m_pad * m_pad + m_pad) * itemsize
    io_bytes = 2 * (tb * d_pad + tb * 128) * itemsize   # double-buffered x / out tiles
    act_bytes = 2 * tb * m_pad * itemsize               # in-body intermediate activations
    return w_bytes + io_bytes + act_bytes


def fc_network_apply(x, params, *, batch_tile=256):
    """Fused forward pass. x: (B, d) float32. Returns (B, 1) float32."""
    hidden = params["hidden"]
    w_last = params["w_last"]
    d, d_pad, m_pad = params["d"], params["d_pad"], params["m_pad"]
    num_hidden = len(hidden)

    B = x.shape[0]
    assert x.shape[1] == d

    # Batch tile: multiple of 8 sublanes; 256-512 keeps the MXU M-dim well fed on v5e/v6e/v7x.
    tb = _round_up(min(batch_tile, _round_up(B, 8)), 8)
    b_pad = _round_up(B, tb)

    x_p = jnp.pad(x.astype(jnp.float32), ((0, b_pad - B), (0, d_pad - d)))

    in_specs = [pl.BlockSpec((tb, d_pad), lambda i: (i, 0))]
    # Weights: constant index maps -> fetched once and kept VMEM-resident across batch tiles.
    # TODO(synk): when m*m*dtype exceeds VMEM (especially v7x's 64 MiB), stream W_l in K/N
    # chunks (pltpu.emit_pipeline / an "arbitrary" reduction axis with a VMEM accumulator),
    # single-buffer the resident weights (pipeline_mode=pl.Buffered(1)), and/or cast to bf16.
    for w in hidden:
        in_specs.append(pl.BlockSpec(w.shape, lambda i: (0, 0)))
    in_specs.append(pl.BlockSpec(w_last.shape, lambda i: (0, 0)))

    out_specs = pl.BlockSpec((tb, 128), lambda i: (i, 0))

    est = _estimate_vmem_bytes(tb, d_pad, m_pad, num_hidden)
    vmem_limit = None
    if est > (24 << 20):                      # above the smallest default scoped VMEM limit
        vmem_limit = min(int(est * 3 // 2), 64 << 20)   # cap at v7x physical VMEM

    kernel = functools.partial(_fc_network_kernel, num_hidden=num_hidden)

    out = pl.pallas_call(
        kernel,
        out_shape=jax.ShapeDtypeStruct((b_pad, 128), jnp.float32),
        grid_spec=pltpu.PrefetchScalarGridSpec(
            num_scalar_prefetch=0,
            grid=(b_pad // tb,),
            in_specs=in_specs,
            out_specs=out_specs,
        ),
        compiler_params=pltpu.CompilerParams(
            dimension_semantics=("parallel",),   # independent batch tiles -> v7x 2-TC sharding
            vmem_limit_bytes=vmem_limit,
        ),
    )(x_p, *hidden, w_last)

    return out[:B, :1]


def fc_network_forward(x, weights, *, m, batch_tile=256):
    """Convenience entry taking PyTorch-layout weights (preps per call; prefer prepare+apply)."""
    return fc_network_apply(x, prepare_fc_params(weights, m=m), batch_tile=batch_tile)


def fc_network_reference(x, weights, *, m):
    """Pure-JAX reference mirroring the PyTorch FCNetwork exactly."""
    L = len(weights)
    inv_m = 1.0 / float(m)
    scales = [1.0] + [inv_m] * (L - 1)
    h = x
    for l in range(L - 1):
        h = scales[l] * jax.nn.relu(h @ weights[l].T)
    return scales[L - 1] * (h @ weights[L - 1].T)


if __name__ == "__main__":
    key = jax.random.PRNGKey(0)

    # Case 1: FCNetwork(L=3, m=32, d=32, bias=False, scaling='mf'), small batch.
    L, m, d, batch = 3, 32, 32, 8
    key, kx, k0, k1, k2 = jax.random.split(key, 5)
    x = jax.random.normal(kx, (batch, d), dtype=jnp.float32)
    weights = [
        jax.random.normal(k0, (m, d), dtype=jnp.float32) * (1.0 / jnp.sqrt(d)),
        jax.random.normal(k1, (m, m), dtype=jnp.float32) * (1.0 / jnp.sqrt(m)),
        jax.random.normal(k2, (1, m), dtype=jnp.float32) * (1.0 / jnp.sqrt(m)),
    ]
    params = prepare_fc_params(weights, m=m)       # one-time prep, outside hot path
    out = jax.block_until_ready(fc_network_apply(x, params))
    ref = fc_network_reference(x, weights, m=m)
    assert out.shape == (batch, 1), out.shape
    assert jnp.allclose(out, ref, atol=1e-5, rtol=1e-5), float(jnp.max(jnp.abs(out - ref)))

    # Case 2: exercises L=4, feature padding, and multiple batch tiles (grid=(3,)).
    L2, m2, d2, batch2 = 4, 128, 64, 300
    key, kx2, *kws = jax.random.split(key, 2 + L2)
    x2 = jax.random.normal(kx2, (batch2, d2), dtype=jnp.float32)
    sizes = [(m2, d2)] + [(m2, m2)] * (L2 - 2) + [(1, m2)]
    weights2 = [jax.random.normal(kws[l], sizes[l], dtype=jnp.float32)
                * (1.0 / jnp.sqrt(sizes[l][1])) for l in range(L2)]
    params2 = prepare_fc_params(weights2, m=m2)
    out2 = jax.block_until_ready(fc_network_apply(x2, params2, batch_tile=128))
    ref2 = fc_network_reference(x2, weights2, m=m2)
    assert out2.shape == (batch2, 1), out2.shape
    assert jnp.allclose(out2, ref2, atol=1e-4, rtol=1e-4), float(jnp.max(jnp.abs(out2 - ref2)))

    print("KERNEL_OK")
</pallas_src>

<mosaic_0001>
module attributes {stable_mosaic.version = 11 : i64} {
  func.func @_fc_network_kernel(%arg0: i32, %arg1: memref<8x128xf32, #tpu.memory_space<vmem>>, %arg2: memref<128x128xf32, #tpu.memory_space<vmem>>, %arg3: memref<128x128xf32, #tpu.memory_space<vmem>>, %arg4: memref<1x128xf32, #tpu.memory_space<vmem>>, %arg5: memref<8x128xf32, #tpu.memory_space<vmem>>) attributes {dimension_semantics = [#tpu.dimension_semantics<parallel>], iteration_bounds = array<i64: 1>, scalar_prefetch = 0 : i64, scratch_operands = 0 : i64, tpu.core_type = #tpu.core_type<tc>, window_params = [{transform_indices = @transform_0, window_bounds = array<i64: 8, 128>}, {pipeline_mode = #tpu.pipeline_mode<synchronous>, transform_indices = @transform_1, window_bounds = array<i64: 128, 128>}, {pipeline_mode = #tpu.pipeline_mode<synchronous>, transform_indices = @transform_2, window_bounds = array<i64: 128, 128>}, {pipeline_mode = #tpu.pipeline_mode<synchronous>, transform_indices = @transform_3, window_bounds = array<i64: 1, 128>}, {transform_indices = @transform_4, window_bounds = array<i64: 8, 128>}]} {
    %c0 = arith.constant 0 : index
    %c0_0 = arith.constant 0 : index
    %0 = vector.load %arg1[%c0, %c0_0] : memref<8x128xf32, #tpu.memory_space<vmem>>, vector<8x128xf32>
    %c0_1 = arith.constant 0 : index
    %c0_2 = arith.constant 0 : index
    %1 = vector.load %arg2[%c0_1, %c0_2] : memref<128x128xf32, #tpu.memory_space<vmem>>, vector<128x128xf32>
    %cst = arith.constant dense<0.000000e+00> : vector<8x128xf32>
    %2 = tpu.matmul %0, %1, %cst {dimension_numbers = #tpu.dot_dimension_numbers<[1], [0], [0], [1], [0, 0, 1, 1], [], []>} : vector<8x128xf32>, vector<128x128xf32>, vector<8x128xf32> -> vector<8x128xf32>
    %cst_3 = arith.constant 0.000000e+00 : f32
    %3 = vector.broadcast %cst_3 : f32 to vector<8x128xf32>
    %4 = arith.maximumf %2, %3 : vector<8x128xf32>
    %c0_4 = arith.constant 0 : index
    %c0_5 = arith.constant 0 : index
    %5 = vector.load %arg3[%c0_4, %c0_5] : memref<128x128xf32, #tpu.memory_space<vmem>>, vector<128x128xf32>
    %cst_6 = arith.constant dense<0.000000e+00> : vector<8x128xf32>
    %6 = tpu.matmul %4, %5, %cst_6 {dimension_numbers = #tpu.dot_dimension_numbers<[1], [0], [0], [1], [0, 0, 1, 1], [], []>} : vector<8x128xf32>, vector<128x128xf32>, vector<8x128xf32> -> vector<8x128xf32>
    %cst_7 = arith.constant 0.000000e+00 : f32
    %7 = vector.broadcast %cst_7 : f32 to vector<8x128xf32>
    %8 = arith.maximumf %6, %7 : vector<8x128xf32>
    %c0_8 = arith.constant 0 : index
    %c0_9 = arith.constant 0 : index
    %9 = vector.load %arg4[%c0_8, %c0_9] : memref<1x128xf32, #tpu.memory_space<vmem>>, vector<1x128xf32>
    %10 = vector.broadcast %9 : vector<1x128xf32> to vector<8x128xf32>
    %11 = arith.mulf %8, %10 : vector<8x128xf32>
    %cst_10 = arith.constant dense<0.000000e+00> : vector<8xf32>
    %12 = vector.multi_reduction <add>, %11, %cst_10 [1] : vector<8x128xf32> to vector<8xf32>
    %13 = vector.shape_cast %12 : vector<8xf32> to vector<8x1xf32>
    %14 = vector.shape_cast %13 : vector<8x1xf32> to vector<8x1xf32>
    %15 = vector.broadcast %14 : vector<8x1xf32> to vector<8x128xf32>
    %c0_11 = arith.constant 0 : index
    %c0_12 = arith.constant 0 : index
    %16 = vector.load %arg5[%c0_11, %c0_12] : memref<8x128xf32, #tpu.memory_space<vmem>>, vector<8x128xf32>
    tpu.vector_store %arg5[%c0_11, %c0_12], %15 {strides = array<i32>} : memref<8x128xf32, #tpu.memory_space<vmem>>, vector<8x128xf32>,
    return
  }
  func.func @transform_0(%arg0: i32) -> (i32, i32) {
    %c0_i32 = arith.constant 0 : i32
    %c0_i32_0 = arith.constant 0 : i32
    return %arg0, %c0_i32 : i32, i32
  }
  func.func @transform_1(%arg0: i32) -> (i32, i32) {
    %c0_i32 = arith.constant 0 : i32
    %c0_i32_0 = arith.constant 0 : i32
    %c0_i32_1 = arith.constant 0 : i32
    return %c0_i32, %c0_i32_0 : i32, i32
  }
  func.func @transform_2(%arg0: i32) -> (i32, i32) {
    %c0_i32 = arith.constant 0 : i32
    %c0_i32_0 = arith.constant 0 : i32
    %c0_i32_1 = arith.constant 0 : i32
    return %c0_i32, %c0_i32_0 : i32, i32
  }
  func.func @transform_3(%arg0: i32) -> (i32, i32) {
    %c0_i32 = arith.constant 0 : i32
    %c0_i32_0 = arith.constant 0 : i32
    %c0_i32_1 = arith.constant 0 : i32
    return %c0_i32, %c0_i32_0 : i32, i32
  }
  func.func @transform_4(%arg0: i32) -> (i32, i32) {
    %c0_i32 = arith.constant 0 : i32
    %c0_i32_0 = arith.constant 0 : i32
    return %arg0, %c0_i32 : i32, i32
  }
}

</mosaic_0001>

<llo_original>
// kernel: tpu_custom_call.1
$region0: #{tpu_custom_call.1}
  #allocation0 [shape = 'u32[]', space=smem, size = 0x4, offset = 0x4, fixed_abs, tag = 'smem constant byte address 0x4 - core index']
  #allocation1 [shape = 'u32[72,128]{1,0:T(1,128)}', space=vmem, size = 0x9000, scoped, tag = 'internal scratch']
  %s0 = inlined_call_operand.hbm [shape: f32[8,128], index: 0, kind: input, shape index: {}]
  %s1 = inlined_call_operand.hbm [shape: f32[128,128], index: 1, kind: input, shape index: {}]
  %s2 = inlined_call_operand.hbm [shape: f32[128,128], index: 2, kind: input, shape index: {}]
  %s3 = inlined_call_operand.vmem [shape: f32[1,128], index: 3, kind: input, shape index: {}]
  %s4 = inlined_call_operand.hbm [shape: f32[8,128], index: 4, kind: output, shape index: {}]
  %s5 = sld [smem:[#allocation0]]
  $region38: #{tpu_custom_call.1} parent=0
    _
  %s7 = ssub.s32 1, %s5
  %s8 = scalar_select 0, %s7, %s5
  $region1: #{tpu_custom_call.1} parent=0
    #allocation2 [shape = 'u8[4096]{0}', space=vmem, size = 0x1000, scoped, tag = 'input window, operand 0, single buffered']
    #allocation3 [shape = 's32[1]{0}', space=sflag, size = 0x4, scoped, tag = 'scoped memory for tpu_custom_call.1']
    #allocation4 [shape = 's32[1]{0}', space=sflag, size = 0x4, scoped, tag = 'scoped memory for tpu_custom_call.1']
    #allocation5 [shape = 'u8[65536]{0}', space=vmem, size = 0x10000, scoped, tag = 'input window, operand 1, single buffered']
    #allocation6 [shape = 's32[1]{0}', space=sflag, size = 0x4, scoped, tag = 'scoped memory for tpu_custom_call.1']
    #allocation7 [shape = 'u8[65536]{0}', space=vmem, size = 0x10000, scoped, tag = 'input window, operand 2, single buffered']
    #allocation8 [shape = 'u8[4096]{0}', space=vmem, size = 0x1000, scoped, tag = 'output window, operand 0, single buffered']
    %9 = vsyncpa [#allocation3], 0
    %10 = vsyncpa [#allocation6], 0
    %11 = vsyncpa [#allocation4], 0
    // Predicated region
    $region2: #{tpu_custom_call.1} parent=1 // pred_check
      _
    $region3: #{tpu_custom_call.1} parent=1 // pred_check_branch
      %13 = sbr.rel (0) target = $region5
    $region4: #{tpu_custom_call.1} parent=1 // pred_region
      %15 = vsyncadd [#allocation3], 0
      %s17 = sshll.u32 %s0, 4
      %s18 = int_to_ptr.hbm [resolvable:$true] %s17
      %s19 = sshll.u32 [#allocation2], 4
      %s20 = int_to_ptr.vmem [resolvable:$true] %s19
      %22 = dma.hbm_to_vmem [thread:$0]  %s18, 128, %s20, [#allocation3]
    $region5: #{tpu_custom_call.1} parent=1 // pred_fallthru
      _
    // Predicated region
    $region6: #{tpu_custom_call.1} parent=1 // pred_check
      _
    $region7: #{tpu_custom_call.1} parent=1 // pred_check_branch
      %24 = sbr.rel (0) target = $region9
    $region8: #{tpu_custom_call.1} parent=1 // pred_region
      %26 = vsyncadd [#allocation6], 0
      %s27 = sshll.u32 %s1, 4
      %s28 = int_to_ptr.hbm [resolvable:$true] %s27
      %s29 = sshll.u32 [#allocation5], 4
      %s30 = int_to_ptr.vmem [resolvable:$true] %s29
      %35 = dma.hbm_to_vmem [thread:$0]  %s28, 2048, %s30, [#allocation6], 128, 128, 8
    $region9: #{tpu_custom_call.1} parent=1 // pred_fallthru
      _
    // Predicated region
    $region10: #{tpu_custom_call.1} parent=1 // pred_check
      _
    $region11: #{tpu_custom_call.1} parent=1 // pred_check_branch
      %37 = sbr.rel (0) target = $region13
    $region12: #{tpu_custom_call.1} parent=1 // pred_region
      %39 = vsyncadd [#allocation6], 0
      %s40 = sshll.u32 %s2, 4
      %s41 = int_to_ptr.hbm [resolvable:$true] %s40
      %s42 = sshll.u32 [#allocation7], 4
      %s43 = int_to_ptr.vmem [resolvable:$true] %s42
      %48 = dma.hbm_to_vmem [thread:$0]  %s41, 2048, %s43, [#allocation6], 128, 128, 8
    $region13: #{tpu_custom_call.1} parent=1 // pred_fallthru
      _
    // Predicated region
    $region14: #{tpu_custom_call.1} parent=1 // pred_check
      _
    $region15: #{tpu_custom_call.1} parent=1 // pred_check_branch
      %50 = sbr.rel (0) target = $region17
    $region16: #{tpu_custom_call.1} parent=1 // pred_region
      _
    $region17: #{tpu_custom_call.1} parent=1 // pred_fallthru
      _
    // Predicated region
    $region18: #{tpu_custom_call.1} parent=1 // pred_check
      _
    $region19: #{tpu_custom_call.1} parent=1 // pred_check_branch
      %52 = sbr.rel (0) target = $region21
    $region20: #{tpu_custom_call.1} parent=1 // pred_region
      %54 = dma.done [#allocation3], 128
    $region21: #{tpu_custom_call.1} parent=1 // pred_fallthru
      _
    // Predicated region
    $region22: #{tpu_custom_call.1} parent=1 // pred_check
      _
    $region23: #{tpu_custom_call.1} parent=1 // pred_check_branch
      %56 = sbr.rel (0) target = $region25
    $region24: #{tpu_custom_call.1} parent=1 // pred_region
      %58 = dma.done [#allocation6], 2048
    $region25: #{tpu_custom_call.1} parent=1 // pred_fallthru
      _
    // Predicated region
    $region26: #{tpu_custom_call.1} parent=1 // pred_check
      _
    $region27: #{tpu_custom_call.1} parent=1 // pred_check_branch
      %60 = sbr.rel (0) target = $region29
    $region28: #{tpu_custom_call.1} parent=1 // pred_region
      %62 = dma.done [#allocation6], 2048
    $region29: #{tpu_custom_call.1} parent=1 // pred_fallthru
      _
    %v63 = vld [vmem:[#allocation2] sm:$0xff]
    %v64 = vld [vmem:[#allocation5] sm:$0xff]
    %v65 = vld [vmem:[#allocation5 + $0x8] sm:$0xff]
    %v66 = vld [vmem:[#allocation5 + $0x10] sm:$0xff]
    %v67 = vld [vmem:[#allocation5 + $0x18] sm:$0xff]
    %v68 = vld [vmem:[#allocation5 + $0x20] sm:$0xff]
    %v69 = vld [vmem:[#allocation5 + $0x28] sm:$0xff]
    %v70 = vld [vmem:[#allocation5 + $0x30] sm:$0xff]
    %v71 = vld [vmem:[#allocation5 + $0x38] sm:$0xff]
    %v72 = vld [vmem:[#allocation5 + $0x40] sm:$0xff]
    %v73 = vld [vmem:[#allocation5 + $0x48] sm:$0xff]
    %v74 = vld [vmem:[#allocation5 + $0x50] sm:$0xff]
    %v75 = vld [vmem:[#allocation5 + $0x58] sm:$0xff]
    %v76 = vld [vmem:[#allocation5 + $0x60] sm:$0xff]
    %v77 = vld [vmem:[#allocation5 + $0x68] sm:$0xff]
    %v78 = vld [vmem:[#allocation5 + $0x70] sm:$0xff]
    %v79 = vld [vmem:[#allocation5 + $0x78] sm:$0xff]
    %80 = vmatpush.msra.mxu0 %v79
    %81 = vmatpush.msra.mxu0 %v78
    %82 = vmatpush.msra.mxu0 %v77
    %83 = vmatpush.msra.mxu0 %v76
    %84 = vmatpush.msra.mxu0 %v75
    %85 = vmatpush.msra.mxu0 %v74
    %86 = vmatpush.msra.mxu0 %v73
    %87 = vmatpush.msra.mxu0 %v72
    %88 = vmatpush.msra.mxu0 %v71
    %89 = vmatpush.msra.mxu0 %v70
    %90 = vmatpush.msra.mxu0 %v69
    %91 = vmatpush.msra.mxu0 %v68
    %92 = vmatpush.msra.mxu0 %v67
    %93 = vmatpush.msra.mxu0 %v66
    %94 = vmatpush.msra.mxu0 %v65
    %95 = vmatpush.msra.mxu0 %v64
    %96 = vmatmul.f32.gmra.mxu0 %v63
    %v97 = vpop.f32.mrf.mxu0
    %v98 = vadd.f32 0.0, %v97
    %99 = vdwg.mxu0
    %v100 = vmax.f32 %v98, 0.0
    %v101 = vld [vmem:[#allocation7] sm:$0xff]
    %v102 = vld [vmem:[#allocation7 + $0x8] sm:$0xff]
    %v103 = vld [vmem:[#allocation7 + $0x10] sm:$0xff]
    %v104 = vld [vmem:[#allocation7 + $0x18] sm:$0xff]
    %v105 = vld [vmem:[#allocation7 + $0x20] sm:$0xff]
    %v106 = vld [vmem:[#allocation7 + $0x28] sm:$0xff]
    %v107 = vld [vmem:[#allocation7 + $0x30] sm:$0xff]
    %v108 = vld [vmem:[#allocation7 + $0x38] sm:$0xff]
    %v109 = vld [vmem:[#allocation7 + $0x40] sm:$0xff]
    %v110 = vld [vmem:[#allocation7 + $0x48] sm:$0xff]
    %v111 = vld [vmem:[#allocation7 + $0x50] sm:$0xff]
    %v112 = vld [vmem:[#allocation7 + $0x58] sm:$0xff]
    %v113 = vld [vmem:[#allocation7 + $0x60] sm:$0xff]
    %v114 = vld [vmem:[#allocation7 + $0x68] sm:$0xff]
    %v115 = vld [vmem:[#allocation7 + $0x70] sm:$0xff]
    %v116 = vld [vmem:[#allocation7 + $0x78] sm:$0xff]
    %117 = vmatpush.msra.mxu0 %v116
    %118 = vmatpush.msra.mxu0 %v115
    %119 = vmatpush.msra.mxu0 %v114
    %120 = vmatpush.msra.mxu0 %v113
    %121 = vmatpush.msra.mxu0 %v112
    %122 = vmatpush.msra.mxu0 %v111
    %123 = vmatpush.msra.mxu0 %v110
    %124 = vmatpush.msra.mxu0 %v109
    %125 = vmatpush.msra.mxu0 %v108
    %126 = vmatpush.msra.mxu0 %v107
    %127 = vmatpush.msra.mxu0 %v106
    %128 = vmatpush.msra.mxu0 %v105
    %129 = vmatpush.msra.mxu0 %v104
    %130 = vmatpush.msra.mxu0 %v103
    %131 = vmatpush.msra.mxu0 %v102
    %132 = vmatpush.msra.mxu0 %v101
    %133 = vmatmul.f32.gmra.mxu0 %v100
    %v134 = vpop.f32.mrf.mxu0
    %v135 = vadd.f32 0.0, %v134
    %136 = vdwg.mxu0
    %v137 = vmax.f32 %v135, 0.0
    %v138 = vld [vmem:[%s3] sm:$0x1]
    %v140 = vperm.slane %v138, 0
    %v142 = vmul.f32 %v137, %v140
    %143 = vadd.xlane.f32.xlu0 %v142
    %v144 = vpop.xlane.xlu0 %143
    %145 = vst [vmem:[#allocation8] sm:$0xff] %v144
    // Predicated region
    $region30: #{tpu_custom_call.1} parent=1 // pred_check
      _
    $region31: #{tpu_custom_call.1} parent=1 // pred_check_branch
      %147 = sbr.rel (0) target = $region33
    $region32: #{tpu_custom_call.1} parent=1 // pred_region
      %149 = vsyncadd [#allocation4], 0
      %s151 = sshll.u32 [#allocation8], 4
      %s152 = int_to_ptr.vmem [resolvable:$true] %s151
      %s153 = sshll.u32 %s4, 4
      %s154 = int_to_ptr.hbm [resolvable:$true] %s153
      %156 = dma.vmem_to_hbm [thread:$0]  %s152, 128, %s154, [#allocation4]
    $region33: #{tpu_custom_call.1} parent=1 // pred_fallthru
      _
    // Predicated region
    $region34: #{tpu_custom_call.1} parent=1 // pred_check
      _
    $region35: #{tpu_custom_call.1} parent=1 // pred_check_branch
      %158 = sbr.rel (0) target = $region37
    $region36: #{tpu_custom_call.1} parent=1 // pred_region
      %160 = dma.done [#allocation4], 128
    $region37: #{tpu_custom_call.1} parent=1 // pred_fallthru
      _
    %161 = vsyncpa [#allocation3], 1
    %162 = vsyncpa [#allocation6], 1
    %163 = vsyncpa [#allocation4], 1

</llo_original>
